<compile_context>
chip_gen: v6e
topology: v6e:2x2x1
jax: 0.10.0
libtpu: 0.0.40
codegen_flags: <defaults>
</compile_context>

<pallas_src>
import jax
import jax.numpy as jnp
from jax import lax
from jax.experimental import pallas as pl
from jax.experimental.pallas import tpu as pltpu


def _round_up(x, m):
    return ((x + m - 1) // m) * m


def _vmem_capacity_bytes():
    """Physical VMEM per TensorCore; conservative (v7x-sized) fallback."""
    try:
        info = pltpu.get_tpu_info()
        cap = int(getattr(info, "vmem_capacity_bytes", 0) or 0)
        if cap > 0:
            return cap
    except Exception:
        pass
    return 64 * 1024 * 1024


# -----------------------------------------------------------------------------
# Kernel A: batch-in-sublanes layout (small batch tiles, Bt < 128).
#   carries (Bt, H), gates (Bt, 4H) = h @ W_hh^T + xW[t]
# -----------------------------------------------------------------------------
def _make_lstm_kernel_bsub(hidden_dim, t_block, seq_len, needs_time_mask, unroll):
    H = hidden_dim

    def kernel(xw_ref, whh_ref, wlab_ref, y_ref, h_out_ref, c_out_ref, h_sc, c_sc):
        tb = pl.program_id(1)          # time-block index (sequential / "arbitrary")

        @pl.when(tb == 0)              # init_hidden(): zeros at sequence start
        def _():
            h_sc[...] = jnp.zeros_like(h_sc)
            c_sc[...] = jnp.zeros_like(c_sc)

        whh = whh_ref[...]             # (H, 4H), loop-invariant load hoisted

        def step(t, carry):
            h, c = carry               # f32 carries, (Bt, H)
            gates = (jnp.dot(h.astype(whh.dtype), whh,
                             preferred_element_type=jnp.float32)
                     + xw_ref[t].astype(jnp.float32))            # (Bt, 4H)
            i_g = jax.nn.sigmoid(gates[:, 0 * H:1 * H])
            f_g = jax.nn.sigmoid(gates[:, 1 * H:2 * H])
            g_g = jnp.tanh(gates[:, 2 * H:3 * H])
            o_g = jax.nn.sigmoid(gates[:, 3 * H:4 * H])
            c_new = f_g * c + i_g * g_g
            h_new = o_g * jnp.tanh(c_new)
            if needs_time_mask:        # only traced when T % Tb != 0
                valid = (tb * t_block + t) < seq_len
                h_new = jnp.where(valid, h_new, h)
                c_new = jnp.where(valid, c_new, c)
            return h_new, c_new

        h, c = lax.fori_loop(0, t_block, step, (h_sc[...], c_sc[...]),
                             unroll=unroll)
        h_sc[...] = h
        c_sc[...] = c

        @pl.when(tb == pl.num_programs(1) - 1)
        def _():
            h_out_ref[...] = h
            c_out_ref[...] = c
            # N=1 head as VPU multiply + lane reduce; b_label added in wrapper.
            y_ref[...] = jnp.sum(h * wlab_ref[...], axis=-1, keepdims=True)

    return kernel


# -----------------------------------------------------------------------------
# Kernel B: batch-in-lanes layout (Bt >= 128).
#   carries (H, Bt), gates (4H, Bt) = W_hh(4H,H) @ h(H,Bt) + xW[t]
#   -> gate slices are sublane-aligned, full 128-lane vregs.
# -----------------------------------------------------------------------------
def _make_lstm_kernel_blane(hidden_dim, t_block, seq_len, needs_time_mask, unroll):
    H = hidden_dim

    def kernel(xw_ref, whh_ref, wlab_ref, y_ref, h_out_ref, c_out_ref, h_sc, c_sc):
        tb = pl.program_id(1)

        @pl.when(tb == 0)
        def _():
            h_sc[...] = jnp.zeros_like(h_sc)
            c_sc[...] = jnp.zeros_like(c_sc)

        whh = whh_ref[...]             # (4H, H)  (PyTorch-native layout)

        def step(t, carry):
            h, c = carry               # f32 carries, (H, Bt)
            gates = (jnp.dot(whh, h.astype(whh.dtype),
                             preferred_element_type=jnp.float32)
                     + xw_ref[t].astype(jnp.float32))            # (4H, Bt)
            i_g = jax.nn.sigmoid(gates[0 * H:1 * H, :])
            f_g = jax.nn.sigmoid(gates[1 * H:2 * H, :])
            g_g = jnp.tanh(gates[2 * H:3 * H, :])
            o_g = jax.nn.sigmoid(gates[3 * H:4 * H, :])
            c_new = f_g * c + i_g * g_g
            h_new = o_g * jnp.tanh(c_new)
            if needs_time_mask:
                valid = (tb * t_block + t) < seq_len
                h_new = jnp.where(valid, h_new, h)
                c_new = jnp.where(valid, c_new, c)
            return h_new, c_new

        h, c = lax.fori_loop(0, t_block, step, (h_sc[...], c_sc[...]),
                             unroll=unroll)
        h_sc[...] = h
        c_sc[...] = c

        @pl.when(tb == pl.num_programs(1) - 1)
        def _():
            h_out_ref[...] = h
            c_out_ref[...] = c
            # w_label passed as (H, 1): broadcast-mul + sublane reduce -> (1, Bt).
            y_ref[...] = jnp.sum(h * wlab_ref[...], axis=0, keepdims=True)

    return kernel


# -----------------------------------------------------------------------------
# Wrapper
# -----------------------------------------------------------------------------
def lstm_classifier_forward(sentence, params, *, matmul_dtype=jnp.bfloat16,
                            stream_dtype=None, max_t_block=256, max_b_tile=256,
                            unroll=None, fuse_embed_proj=None):
    """sentence: (T, B) int32 token ids. Returns (y, (h_n, c_n)) like the PyTorch module."""
    emb = params["embedding"]           # (V, E)
    w_ih = params["w_ih"]               # (4H, E)  PyTorch layout
    w_hh = params["w_hh"]               # (4H, H)
    b_ih = params["b_ih"]               # (4H,)
    b_hh = params["b_hh"]               # (4H,)
    w_lab = params["w_label"]           # (1, H)
    b_lab = params["b_label"]           # (1,)

    if stream_dtype is None:
        stream_dtype = matmul_dtype     # bf16 streaming of xW by default

    T, B = sentence.shape
    V, E = emb.shape
    H = w_hh.shape[1]

    # ---- batch tiling: sublane multiple; prefer >=2 tiles of >=128 (v7x 2 TCs) --
    B_pad = _round_up(B, 8)
    if B_pad >= 2 * 128:
        Bt = 256 if B_pad >= 2 * 256 else 128
        Bt = min(Bt, max_b_tile)
        B_pad = _round_up(B_pad, Bt)
    else:
        Bt = min(B_pad, max_b_tile)
        B_pad = _round_up(B_pad, Bt)
    n_b = B_pad // Bt
    batch_in_lanes = Bt >= 128

    # ---- VMEM budget -> time-block size and vmem_limit_bytes --------------------
    vmem_cap = _vmem_capacity_bytes()
    vmem_budget = int(vmem_cap * 0.75)                 # ~96 MiB v6e/v5e, ~48 MiB v7x
    s_item = jnp.dtype(stream_dtype).itemsize
    m_item = jnp.dtype(matmul_dtype).itemsize
    fixed_bytes = (4 * H * H * m_item                  # W_hh (single-buffered)
                   + H * 4                             # w_label
                   + 2 * Bt * H * 4                    # h/c f32 scratch
                   + 2 * (2 * Bt * H * 4 + Bt * 4))    # double-buffered outputs
    xw_budget = max(vmem_budget - fixed_bytes - (1 << 20), 1 << 20)
    tb_vmem = max(1, xw_budget // (2 * Bt * 4 * H * s_item))   # 2x = double-buffer
    Tb = int(min(T, max_t_block, tb_vmem))
    T_pad = _round_up(T, Tb)
    n_tb = T_pad // Tb
    needs_time_mask = T_pad != T
    if unroll is None:
        unroll = True if Tb <= 32 else 8

    # ---- glue: embedding + input projection (fused into a (V, 4H) table) --------
    bias = (b_ih + b_hh).astype(jnp.float32)
    if fuse_embed_proj is None:
        fuse_embed_proj = V <= max(4 * T * B, 4096)
    if fuse_embed_proj:
        proj_tbl = (jnp.dot(emb.astype(matmul_dtype),
                            jnp.transpose(w_ih).astype(matmul_dtype),
                            preferred_element_type=jnp.float32) + bias)   # (V, 4H)
        xw = proj_tbl[sentence]                                           # (T, B, 4H)
    else:
        x = emb[sentence].astype(matmul_dtype)                            # (T, B, E)
        xw = (jnp.dot(x.reshape(T * B, E),
                      jnp.transpose(w_ih).astype(matmul_dtype),
                      preferred_element_type=jnp.float32)
              + bias).reshape(T, B, 4 * H)
    xw = xw.astype(stream_dtype)

    if batch_in_lanes:
        xw = jnp.transpose(xw, (0, 2, 1))                                 # (T, 4H, B)
        xw = jnp.pad(xw, ((0, T_pad - T), (0, 0), (0, B_pad - B)))
        whh_k = w_hh.astype(matmul_dtype)                                 # (4H, H)
        wlab_k = jnp.transpose(w_lab).astype(jnp.float32)                 # (H, 1)
        kernel = _make_lstm_kernel_blane(H, Tb, T, needs_time_mask, unroll)
        in_specs = [
            pl.BlockSpec((Tb, 4 * H, Bt), lambda b, t: (t, 0, b)),
            pl.BlockSpec((4 * H, H), lambda b, t: (0, 0),
                         pipeline_mode=pl.Buffered(1)),
            pl.BlockSpec((H, 1), lambda b, t: (0, 0),
                         pipeline_mode=pl.Buffered(1)),
        ]
        out_specs = [
            pl.BlockSpec((1, Bt), lambda b, t: (0, b)),
            pl.BlockSpec((H, Bt), lambda b, t: (0, b)),
            pl.BlockSpec((H, Bt), lambda b, t: (0, b)),
        ]
        out_shape = (
            jax.ShapeDtypeStruct((1, B_pad), jnp.float32),
            jax.ShapeDtypeStruct((H, B_pad), jnp.float32),
            jax.ShapeDtypeStruct((H, B_pad), jnp.float32),
        )
        scratch = [pltpu.VMEM((H, Bt), jnp.float32),
                   pltpu.VMEM((H, Bt), jnp.float32)]
    else:
        xw = jnp.pad(xw, ((0, T_pad - T), (0, B_pad - B), (0, 0)))        # (T_pad,B_pad,4H)
        whh_k = jnp.transpose(w_hh).astype(matmul_dtype)                  # (H, 4H)
        wlab_k = w_lab.astype(jnp.float32)                                # (1, H)
        kernel = _make_lstm_kernel_bsub(H, Tb, T, needs_time_mask, unroll)
        in_specs = [
            pl.BlockSpec((Tb, Bt, 4 * H), lambda b, t: (t, b, 0)),
            pl.BlockSpec((H, 4 * H), lambda b, t: (0, 0),
                         pipeline_mode=pl.Buffered(1)),
            pl.BlockSpec((1, H), lambda b, t: (0, 0),
                         pipeline_mode=pl.Buffered(1)),
        ]
        out_specs = [
            pl.BlockSpec((Bt, 1), lambda b, t: (b, 0)),
            pl.BlockSpec((Bt, H), lambda b, t: (b, 0)),
            pl.BlockSpec((Bt, H), lambda b, t: (b, 0)),
        ]
        out_shape = (
            jax.ShapeDtypeStruct((B_pad, 1), jnp.float32),
            jax.ShapeDtypeStruct((B_pad, H), jnp.float32),
            jax.ShapeDtypeStruct((B_pad, H), jnp.float32),
        )
        scratch = [pltpu.VMEM((Bt, H), jnp.float32),
                   pltpu.VMEM((Bt, H), jnp.float32)]

    y_raw, h_raw, c_raw = pl.pallas_call(
        kernel,
        grid=(n_b, n_tb),                              # (batch tiles, time blocks)
        in_specs=in_specs,
        out_specs=out_specs,
        out_shape=out_shape,
        scratch_shapes=scratch,
        compiler_params=pltpu.CompilerParams(
            dimension_semantics=("parallel", "arbitrary"),   # batch parallel, time serial
            vmem_limit_bytes=int(vmem_budget),
        ),
    )(xw, whh_k, wlab_k)

    if batch_in_lanes:
        y = jnp.transpose(y_raw)[:B] + b_lab
        h_n = jnp.transpose(h_raw)[:B]
        c_n = jnp.transpose(c_raw)[:B]
    else:
        y = y_raw[:B] + b_lab
        h_n = h_raw[:B]
        c_n = c_raw[:B]

    # PyTorch returns hidden as (num_layers=1, B, H)
    return y, (h_n[None, :, :], c_n[None, :, :])


# -----------------------------------------------------------------------------
# Pure-JAX reference and param init (for the in-script correctness check)
# -----------------------------------------------------------------------------
def _reference_forward(sentence, params):
    emb = params["embedding"]
    w_ih, w_hh = params["w_ih"], params["w_hh"]
    b_ih, b_hh = params["b_ih"], params["b_hh"]
    w_lab, b_lab = params["w_label"], params["b_label"]
    T, B = sentence.shape
    H = w_hh.shape[1]
    x = emb[sentence].astype(jnp.float32)

    def step(carry, x_t):
        h, c = carry
        gates = x_t @ w_ih.T + h @ w_hh.T + b_ih + b_hh
        i = jax.nn.sigmoid(gates[:, 0 * H:1 * H])
        f = jax.nn.sigmoid(gates[:, 1 * H:2 * H])
        g = jnp.tanh(gates[:, 2 * H:3 * H])
        o = jax.nn.sigmoid(gates[:, 3 * H:4 * H])
        c = f * c + i * g
        h = o * jnp.tanh(c)
        return (h, c), h

    h0 = jnp.zeros((B, H), jnp.float32)
    c0 = jnp.zeros((B, H), jnp.float32)
    (h_n, c_n), outs = jax.lax.scan(step, (h0, c0), x)
    y = outs[-1] @ w_lab.T + b_lab
    return y, (h_n[None], c_n[None])


def init_params(key, vocab_size, embedding_dim, hidden_dim):
    ks = jax.random.split(key, 7)
    H, E, V = hidden_dim, embedding_dim, vocab_size
    s = 1.0 / jnp.sqrt(H)
    return {
        "embedding": jax.random.normal(ks[0], (V, E), jnp.float32),
        "w_ih": jax.random.uniform(ks[1], (4 * H, E), jnp.float32, -s, s),
        "w_hh": jax.random.uniform(ks[2], (4 * H, H), jnp.float32, -s, s),
        "b_ih": jax.random.uniform(ks[3], (4 * H,), jnp.float32, -s, s),
        "b_hh": jax.random.uniform(ks[4], (4 * H,), jnp.float32, -s, s),
        "w_label": jax.random.uniform(ks[5], (1, H), jnp.float32, -s, s),
        "b_label": jax.random.uniform(ks[6], (1,), jnp.float32, -s, s),
    }


if __name__ == "__main__":
    # Shapes consistent with the module's forward:
    #   sentence: (seq_len=8, batch=4), vocab=50, E=16, H=32 (4H = 128 lanes)
    SEQ_LEN, BATCH, VOCAB, EMB_DIM, HID_DIM = 8, 4, 50, 16, 32

    key = jax.random.PRNGKey(0)
    k_tok, k_par, k_tok2 = jax.random.split(key, 3)
    sentence = jax.random.randint(k_tok, (SEQ_LEN, BATCH), 0, VOCAB, dtype=jnp.int32)
    params = init_params(k_par, VOCAB, EMB_DIM, HID_DIM)

    # --- small batch: batch-in-sublanes layout ---------------------------------
    y_bf, (h_bf, c_bf) = lstm_classifier_forward(sentence, params,
                                                 matmul_dtype=jnp.bfloat16)
    y_f32, (h_f32, c_f32) = lstm_classifier_forward(sentence, params,
                                                    matmul_dtype=jnp.float32)
    jax.block_until_ready((y_bf, h_bf, c_bf, y_f32, h_f32, c_f32))
    y_ref, (h_ref, c_ref) = _reference_forward(sentence, params)

    assert y_bf.shape == (BATCH, 1)
    assert h_bf.shape == (1, BATCH, HID_DIM) and c_bf.shape == (1, BATCH, HID_DIM)
    assert jnp.allclose(y_f32, y_ref, atol=1e-4, rtol=1e-4)
    assert jnp.allclose(h_f32, h_ref, atol=1e-4, rtol=1e-4)
    assert jnp.allclose(c_f32, c_ref, atol=1e-4, rtol=1e-4)
    assert jnp.allclose(y_bf, y_ref, atol=5e-2, rtol=5e-2)
    assert jnp.allclose(h_bf, h_ref, atol=5e-2, rtol=5e-2)
    assert jnp.allclose(c_bf, c_ref, atol=5e-2, rtol=5e-2)

    # --- larger batch: exercises batch-in-lanes layout + 2 batch tiles ---------
    BATCH2 = 256
    sentence2 = jax.random.randint(k_tok2, (SEQ_LEN, BATCH2), 0, VOCAB, dtype=jnp.int32)
    y2_f32, (h2_f32, c2_f32) = lstm_classifier_forward(sentence2, params,
                                                       matmul_dtype=jnp.float32)
    y2_bf, (h2_bf, c2_bf) = lstm_classifier_forward(sentence2, params,
                                                    matmul_dtype=jnp.bfloat16)
    jax.block_until_ready((y2_f32, h2_f32, c2_f32, y2_bf, h2_bf, c2_bf))
    y2_ref, (h2_ref, c2_ref) = _reference_forward(sentence2, params)

    assert y2_f32.shape == (BATCH2, 1)
    assert jnp.allclose(y2_f32, y2_ref, atol=1e-4, rtol=1e-4)
    assert jnp.allclose(h2_f32, h2_ref, atol=1e-4, rtol=1e-4)
    assert jnp.allclose(c2_f32, c2_ref, atol=1e-4, rtol=1e-4)
    assert jnp.allclose(y2_bf, y2_ref, atol=1e-1, rtol=1e-1)
    assert jnp.allclose(h2_bf, h2_ref, atol=1e-1, rtol=1e-1)
    assert jnp.allclose(c2_bf, c2_ref, atol=1e-1, rtol=1e-1)

    print("KERNEL_OK")
</pallas_src>

<mosaic_0001>
module attributes {stable_mosaic.version = 11 : i64} {
  func.func @kernel(%arg0: i32, %arg1: i32, %arg2: memref<8x8x128xbf16, #tpu.memory_space<vmem>>, %arg3: memref<32x128xbf16, #tpu.memory_space<vmem>>, %arg4: memref<1x32xf32, #tpu.memory_space<vmem>>, %arg5: memref<8x1xf32, #tpu.memory_space<vmem>>, %arg6: memref<8x32xf32, #tpu.memory_space<vmem>>, %arg7: memref<8x32xf32, #tpu.memory_space<vmem>>, %arg8: memref<8x32xf32, #tpu.memory_space<vmem>>, %arg9: memref<8x32xf32, #tpu.memory_space<vmem>>) attributes {dimension_semantics = [#tpu.dimension_semantics<parallel>, #tpu.dimension_semantics<arbitrary>], iteration_bounds = array<i64: 1, 1>, scalar_prefetch = 0 : i64, scratch_operands = 2 : i64, tpu.core_type = #tpu.core_type<tc>, window_params = [{transform_indices = @transform_0, window_bounds = array<i64: 8, 8, 128>}, {pipeline_mode = #tpu.pipeline_mode<synchronous>, transform_indices = @transform_1, window_bounds = array<i64: 32, 128>}, {pipeline_mode = #tpu.pipeline_mode<synchronous>, transform_indices = @transform_2, window_bounds = array<i64: 1, 32>}, {transform_indices = @transform_3, window_bounds = array<i64: 8, 1>}, {transform_indices = @transform_4, window_bounds = array<i64: 8, 32>}, {transform_indices = @transform_5, window_bounds = array<i64: 8, 32>}]} {
    %c0_i32 = arith.constant 0 : i32
    %0 = arith.cmpi eq, %arg1, %c0_i32 : i32
    %1 = arith.extui %0 : i1 to i32
    %c0_i32_0 = arith.constant 0 : i32
    %2 = arith.cmpi ne, %1, %c0_i32_0 : i32
    scf.if %2 {
      %cst_60 = arith.constant 0.000000e+00 : f32
      %267 = vector.broadcast %cst_60 : f32 to vector<8x32xf32>
      %c0_61 = arith.constant 0 : index
      %c0_62 = arith.constant 0 : index
      %268 = vector.load %arg8[%c0_61, %c0_62] : memref<8x32xf32, #tpu.memory_space<vmem>>, vector<8x32xf32>
      tpu.vector_store %arg8[%c0_61, %c0_62], %267 {strides = array<i32>} : memref<8x32xf32, #tpu.memory_space<vmem>>, vector<8x32xf32>,
      %cst_63 = arith.constant 0.000000e+00 : f32
      %269 = vector.broadcast %cst_63 : f32 to vector<8x32xf32>
      %c0_64 = arith.constant 0 : index
      %c0_65 = arith.constant 0 : index
      %270 = vector.load %arg9[%c0_64, %c0_65] : memref<8x32xf32, #tpu.memory_space<vmem>>, vector<8x32xf32>
      tpu.vector_store %arg9[%c0_64, %c0_65], %269 {strides = array<i32>} : memref<8x32xf32, #tpu.memory_space<vmem>>, vector<8x32xf32>,
    } else {
    }
    %c0 = arith.constant 0 : index
    %c0_1 = arith.constant 0 : index
    %3 = vector.load %arg3[%c0, %c0_1] : memref<32x128xbf16, #tpu.memory_space<vmem>>, vector<32x128xbf16>
    %c0_2 = arith.constant 0 : index
    %c0_3 = arith.constant 0 : index
    %4 = vector.load %arg8[%c0_2, %c0_3] : memref<8x32xf32, #tpu.memory_space<vmem>>, vector<8x32xf32>
    %c0_4 = arith.constant 0 : index
    %c0_5 = arith.constant 0 : index
    %5 = vector.load %arg9[%c0_4, %c0_5] : memref<8x32xf32, #tpu.memory_space<vmem>>, vector<8x32xf32>
    %c0_i32_6 = arith.constant 0 : i32
    %6 = arith.truncf %4 : vector<8x32xf32> to vector<8x32xbf16>
    %cst = arith.constant dense<0.000000e+00> : vector<8x128xf32>
    %7 = tpu.matmul %6, %3, %cst {dimension_numbers = #tpu.dot_dimension_numbers<[1], [0], [0], [1], [0, 0, 1, 1], [], []>} : vector<8x32xbf16>, vector<32x128xbf16>, vector<8x128xf32> -> vector<8x128xf32>
    %8 = arith.index_cast %c0_i32_6 : i32 to index
    %c0_7 = arith.constant 0 : index
    %c0_8 = arith.constant 0 : index
    %9 = vector.load %arg2[%8, %c0_7, %c0_8] : memref<8x8x128xbf16, #tpu.memory_space<vmem>>, vector<1x8x128xbf16>
    %10 = vector.shape_cast %9 : vector<1x8x128xbf16> to vector<8x128xbf16>
    %11 = arith.extf %10 : vector<8x128xbf16> to vector<8x128xf32>
    %12 = arith.addf %7, %11 : vector<8x128xf32>
    %13 = vector.extract_strided_slice %12 {offsets = [0, 0], sizes = [8, 32], strides = [1, 1]} : vector<8x128xf32> to vector<8x32xf32>
    %14 = arith.negf %13 : vector<8x32xf32>
    %15 = math.exp %14 : vector<8x32xf32>
    %cst_9 = arith.constant 1.000000e+00 : f32
    %16 = vector.broadcast %cst_9 : f32 to vector<8x32xf32>
    %17 = arith.addf %16, %15 : vector<8x32xf32>
    %18 = arith.divf %16, %17 : vector<8x32xf32>
    %19 = vector.extract_strided_slice %12 {offsets = [0, 32], sizes = [8, 32], strides = [1, 1]} : vector<8x128xf32> to vector<8x32xf32>
    %20 = arith.negf %19 : vector<8x32xf32>
    %21 = math.exp %20 : vector<8x32xf32>
    %cst_10 = arith.constant 1.000000e+00 : f32
    %22 = vector.broadcast %cst_10 : f32 to vector<8x32xf32>
    %23 = arith.addf %22, %21 : vector<8x32xf32>
    %24 = arith.divf %22, %23 : vector<8x32xf32>
    %25 = vector.extract_strided_slice %12 {offsets = [0, 64], sizes = [8, 32], strides = [1, 1]} : vector<8x128xf32> to vector<8x32xf32>
    %26 = math.tanh %25 : vector<8x32xf32>
    %27 = vector.extract_strided_slice %12 {offsets = [0, 96], sizes = [8, 32], strides = [1, 1]} : vector<8x128xf32> to vector<8x32xf32>
    %28 = arith.negf %27 : vector<8x32xf32>
    %29 = math.exp %28 : vector<8x32xf32>
    %cst_11 = arith.constant 1.000000e+00 : f32
    %30 = vector.broadcast %cst_11 : f32 to vector<8x32xf32>
    %31 = arith.addf %30, %29 : vector<8x32xf32>
    %32 = arith.divf %30, %31 : vector<8x32xf32>
    %33 = arith.mulf %24, %5 : vector<8x32xf32>
    %34 = arith.mulf %18, %26 : vector<8x32xf32>
    %35 = arith.addf %33, %34 : vector<8x32xf32>
    %36 = math.tanh %35 : vector<8x32xf32>
    %37 = arith.mulf %32, %36 : vector<8x32xf32>
    %c1_i32 = arith.constant 1 : i32
    %38 = arith.truncf %37 : vector<8x32xf32> to vector<8x32xbf16>
    %cst_12 = arith.constant dense<0.000000e+00> : vector<8x128xf32>
    %39 = tpu.matmul %38, %3, %cst_12 {dimension_numbers = #tpu.dot_dimension_numbers<[1], [0], [0], [1], [0, 0, 1, 1], [], []>} : vector<8x32xbf16>, vector<32x128xbf16>, vector<8x128xf32> -> vector<8x128xf32>
    %40 = arith.index_cast %c1_i32 : i32 to index
    %c0_13 = arith.constant 0 : index
    %c0_14 = arith.constant 0 : index
    %41 = vector.load %arg2[%40, %c0_13, %c0_14] : memref<8x8x128xbf16, #tpu.memory_space<vmem>>, vector<1x8x128xbf16>
    %42 = vector.shape_cast %41 : vector<1x8x128xbf16> to vector<8x128xbf16>
    %43 = arith.extf %42 : vector<8x128xbf16> to vector<8x128xf32>
    %44 = arith.addf %39, %43 : vector<8x128xf32>
    %45 = vector.extract_strided_slice %44 {offsets = [0, 0], sizes = [8, 32], strides = [1, 1]} : vector<8x128xf32> to vector<8x32xf32>
    %46 = arith.negf %45 : vector<8x32xf32>
    %47 = math.exp %46 : vector<8x32xf32>
    %cst_15 = arith.constant 1.000000e+00 : f32
    %48 = vector.broadcast %cst_15 : f32 to vector<8x32xf32>
    %49 = arith.addf %48, %47 : vector<8x32xf32>
    %50 = arith.divf %48, %49 : vector<8x32xf32>
    %51 = vector.extract_strided_slice %44 {offsets = [0, 32], sizes = [8, 32], strides = [1, 1]} : vector<8x128xf32> to vector<8x32xf32>
    %52 = arith.negf %51 : vector<8x32xf32>
    %53 = math.exp %52 : vector<8x32xf32>
    %cst_16 = arith.constant 1.000000e+00 : f32
    %54 = vector.broadcast %cst_16 : f32 to vector<8x32xf32>
    %55 = arith.addf %54, %53 : vector<8x32xf32>
    %56 = arith.divf %54, %55 : vector<8x32xf32>
    %57 = vector.extract_strided_slice %44 {offsets = [0, 64], sizes = [8, 32], strides = [1, 1]} : vector<8x128xf32> to vector<8x32xf32>
    %58 = math.tanh %57 : vector<8x32xf32>
    %59 = vector.extract_strided_slice %44 {offsets = [0, 96], sizes = [8, 32], strides = [1, 1]} : vector<8x128xf32> to vector<8x32xf32>
    %60 = arith.negf %59 : vector<8x32xf32>
    %61 = math.exp %60 : vector<8x32xf32>
    %cst_17 = arith.constant 1.000000e+00 : f32
    %62 = vector.broadcast %cst_17 : f32 to vector<8x32xf32>
    %63 = arith.addf %62, %61 : vector<8x32xf32>
    %64 = arith.divf %62, %63 : vector<8x32xf32>
    %65 = arith.mulf %56, %35 : vector<8x32xf32>
    %66 = arith.mulf %50, %58 : vector<8x32xf32>
    %67 = arith.addf %65, %66 : vector<8x32xf32>
    %68 = math.tanh %67 : vector<8x32xf32>
    %69 = arith.mulf %64, %68 : vector<8x32xf32>
    %c2_i32 = arith.constant 2 : i32
    %70 = arith.truncf %69 : vector<8x32xf32> to vector<8x32xbf16>
    %cst_18 = arith.constant dense<0.000000e+00> : vector<8x128xf32>
    %71 = tpu.matmul %70, %3, %cst_18 {dimension_numbers = #tpu.dot_dimension_numbers<[1], [0], [0], [1], [0, 0, 1, 1], [], []>} : vector<8x32xbf16>, vector<32x128xbf16>, vector<8x128xf32> -> vector<8x128xf32>
    %72 = arith.index_cast %c2_i32 : i32 to index
    %c0_19 = arith.constant 0 : index
    %c0_20 = arith.constant 0 : index
    %73 = vector.load %arg2[%72, %c0_19, %c0_20] : memref<8x8x128xbf16, #tpu.memory_space<vmem>>, vector<1x8x128xbf16>
    %74 = vector.shape_cast %73 : vector<1x8x128xbf16> to vector<8x128xbf16>
    %75 = arith.extf %74 : vector<8x128xbf16> to vector<8x128xf32>
    %76 = arith.addf %71, %75 : vector<8x128xf32>
    %77 = vector.extract_strided_slice %76 {offsets = [0, 0], sizes = [8, 32], strides = [1, 1]} : vector<8x128xf32> to vector<8x32xf32>
    %78 = arith.negf %77 : vector<8x32xf32>
    %79 = math.exp %78 : vector<8x32xf32>
    %cst_21 = arith.constant 1.000000e+00 : f32
    %80 = vector.broadcast %cst_21 : f32 to vector<8x32xf32>
    %81 = arith.addf %80, %79 : vector<8x32xf32>
    %82 = arith.divf %80, %81 : vector<8x32xf32>
    %83 = vector.extract_strided_slice %76 {offsets = [0, 32], sizes = [8, 32], strides = [1, 1]} : vector<8x128xf32> to vector<8x32xf32>
    %84 = arith.negf %83 : vector<8x32xf32>
    %85 = math.exp %84 : vector<8x32xf32>
    %cst_22 = arith.constant 1.000000e+00 : f32
    %86 = vector.broadcast %cst_22 : f32 to vector<8x32xf32>
    %87 = arith.addf %86, %85 : vector<8x32xf32>
    %88 = arith.divf %86, %87 : vector<8x32xf32>
    %89 = vector.extract_strided_slice %76 {offsets = [0, 64], sizes = [8, 32], strides = [1, 1]} : vector<8x128xf32> to vector<8x32xf32>
    %90 = math.tanh %89 : vector<8x32xf32>
    %91 = vector.extract_strided_slice %76 {offsets = [0, 96], sizes = [8, 32], strides = [1, 1]} : vector<8x128xf32> to vector<8x32xf32>
    %92 = arith.negf %91 : vector<8x32xf32>
    %93 = math.exp %92 : vector<8x32xf32>
    %cst_23 = arith.constant 1.000000e+00 : f32
    %94 = vector.broadcast %cst_23 : f32 to vector<8x32xf32>
    %95 = arith.addf %94, %93 : vector<8x32xf32>
    %96 = arith.divf %94, %95 : vector<8x32xf32>
    %97 = arith.mulf %88, %67 : vector<8x32xf32>
    %98 = arith.mulf %82, %90 : vector<8x32xf32>
    %99 = arith.addf %97, %98 : vector<8x32xf32>
    %100 = math.tanh %99 : vector<8x32xf32>
    %101 = arith.mulf %96, %100 : vector<8x32xf32>
    %c3_i32 = arith.constant 3 : i32
    %102 = arith.truncf %101 : vector<8x32xf32> to vector<8x32xbf16>
    %cst_24 = arith.constant dense<0.000000e+00> : vector<8x128xf32>
    %103 = tpu.matmul %102, %3, %cst_24 {dimension_numbers = #tpu.dot_dimension_numbers<[1], [0], [0], [1], [0, 0, 1, 1], [], []>} : vector<8x32xbf16>, vector<32x128xbf16>, vector<8x128xf32> -> vector<8x128xf32>
    %104 = arith.index_cast %c3_i32 : i32 to index
    %c0_25 = arith.constant 0 : index
    %c0_26 = arith.constant 0 : index
    %105 = vector.load %arg2[%104, %c0_25, %c0_26] : memref<8x8x128xbf16, #tpu.memory_space<vmem>>, vector<1x8x128xbf16>
    %106 = vector.shape_cast %105 : vector<1x8x128xbf16> to vector<8x128xbf16>
    %107 = arith.extf %106 : vector<8x128xbf16> to vector<8x128xf32>
    %108 = arith.addf %103, %107 : vector<8x128xf32>
    %109 = vector.extract_strided_slice %108 {offsets = [0, 0], sizes = [8, 32], strides = [1, 1]} : vector<8x128xf32> to vector<8x32xf32>
    %110 = arith.negf %109 : vector<8x32xf32>
    %111 = math.exp %110 : vector<8x32xf32>
    %cst_27 = arith.constant 1.000000e+00 : f32
    %112 = vector.broadcast %cst_27 : f32 to vector<8x32xf32>
    %113 = arith.addf %112, %111 : vector<8x32xf32>
    %114 = arith.divf %112, %113 : vector<8x32xf32>
    %115 = vector.extract_strided_slice %108 {offsets = [0, 32], sizes = [8, 32], strides = [1, 1]} : vector<8x128xf32> to vector<8x32xf32>
    %116 = arith.negf %115 : vector<8x32xf32>
    %117 = math.exp %116 : vector<8x32xf32>
    %cst_28 = arith.constant 1.000000e+00 : f32
    %118 = vector.broadcast %cst_28 : f32 to vector<8x32xf32>
    %119 = arith.addf %118, %117 : vector<8x32xf32>
    %120 = arith.divf %118, %119 : vector<8x32xf32>
    %121 = vector.extract_strided_slice %108 {offsets = [0, 64], sizes = [8, 32], strides = [1, 1]} : vector<8x128xf32> to vector<8x32xf32>
    %122 = math.tanh %121 : vector<8x32xf32>
    %123 = vector.extract_strided_slice %108 {offsets = [0, 96], sizes = [8, 32], strides = [1, 1]} : vector<8x128xf32> to vector<8x32xf32>
    %124 = arith.negf %123 : vector<8x32xf32>
    %125 = math.exp %124 : vector<8x32xf32>
    %cst_29 = arith.constant 1.000000e+00 : f32
    %126 = vector.broadcast %cst_29 : f32 to vector<8x32xf32>
    %127 = arith.addf %126, %125 : vector<8x32xf32>
    %128 = arith.divf %126, %127 : vector<8x32xf32>
    %129 = arith.mulf %120, %99 : vector<8x32xf32>
    %130 = arith.mulf %114, %122 : vector<8x32xf32>
    %131 = arith.addf %129, %130 : vector<8x32xf32>
    %132 = math.tanh %131 : vector<8x32xf32>
    %133 = arith.mulf %128, %132 : vector<8x32xf32>
    %c4_i32 = arith.constant 4 : i32
    %134 = arith.truncf %133 : vector<8x32xf32> to vector<8x32xbf16>
    %cst_30 = arith.constant dense<0.000000e+00> : vector<8x128xf32>
    %135 = tpu.matmul %134, %3, %cst_30 {dimension_numbers = #tpu.dot_dimension_numbers<[1], [0], [0], [1], [0, 0, 1, 1], [], []>} : vector<8x32xbf16>, vector<32x128xbf16>, vector<8x128xf32> -> vector<8x128xf32>
    %136 = arith.index_cast %c4_i32 : i32 to index
    %c0_31 = arith.constant 0 : index
    %c0_32 = arith.constant 0 : index
    %137 = vector.load %arg2[%136, %c0_31, %c0_32] : memref<8x8x128xbf16, #tpu.memory_space<vmem>>, vector<1x8x128xbf16>
    %138 = vector.shape_cast %137 : vector<1x8x128xbf16> to vector<8x128xbf16>
    %139 = arith.extf %138 : vector<8x128xbf16> to vector<8x128xf32>
    %140 = arith.addf %135, %139 : vector<8x128xf32>
    %141 = vector.extract_strided_slice %140 {offsets = [0, 0], sizes = [8, 32], strides = [1, 1]} : vector<8x128xf32> to vector<8x32xf32>
    %142 = arith.negf %141 : vector<8x32xf32>
    %143 = math.exp %142 : vector<8x32xf32>
    %cst_33 = arith.constant 1.000000e+00 : f32
    %144 = vector.broadcast %cst_33 : f32 to vector<8x32xf32>
    %145 = arith.addf %144, %143 : vector<8x32xf32>
    %146 = arith.divf %144, %145 : vector<8x32xf32>
    %147 = vector.extract_strided_slice %140 {offsets = [0, 32], sizes = [8, 32], strides = [1, 1]} : vector<8x128xf32> to vector<8x32xf32>
    %148 = arith.negf %147 : vector<8x32xf32>
    %149 = math.exp %148 : vector<8x32xf32>
    %cst_34 = arith.constant 1.000000e+00 : f32
    %150 = vector.broadcast %cst_34 : f32 to vector<8x32xf32>
    %151 = arith.addf %150, %149 : vector<8x32xf32>
    %152 = arith.divf %150, %151 : vector<8x32xf32>
    %153 = vector.extract_strided_slice %140 {offsets = [0, 64], sizes = [8, 32], strides = [1, 1]} : vector<8x128xf32> to vector<8x32xf32>
    %154 = math.tanh %153 : vector<8x32xf32>
    %155 = vector.extract_strided_slice %140 {offsets = [0, 96], sizes = [8, 32], strides = [1, 1]} : vector<8x128xf32> to vector<8x32xf32>
    %156 = arith.negf %155 : vector<8x32xf32>
    %157 = math.exp %156 : vector<8x32xf32>
    %cst_35 = arith.constant 1.000000e+00 : f32
    %158 = vector.broadcast %cst_35 : f32 to vector<8x32xf32>
    %159 = arith.addf %158, %157 : vector<8x32xf32>
    %160 = arith.divf %158, %159 : vector<8x32xf32>
    %161 = arith.mulf %152, %131 : vector<8x32xf32>
    %162 = arith.mulf %146, %154 : vector<8x32xf32>
    %163 = arith.addf %161, %162 : vector<8x32xf32>
    %164 = math.tanh %163 : vector<8x32xf32>
    %165 = arith.mulf %160, %164 : vector<8x32xf32>
    %c5_i32 = arith.constant 5 : i32
    %166 = arith.truncf %165 : vector<8x32xf32> to vector<8x32xbf16>
    %cst_36 = arith.constant dense<0.000000e+00> : vector<8x128xf32>
    %167 = tpu.matmul %166, %3, %cst_36 {dimension_numbers = #tpu.dot_dimension_numbers<[1], [0], [0], [1], [0, 0, 1, 1], [], []>} : vector<8x32xbf16>, vector<32x128xbf16>, vector<8x128xf32> -> vector<8x128xf32>
    %168 = arith.index_cast %c5_i32 : i32 to index
    %c0_37 = arith.constant 0 : index
    %c0_38 = arith.constant 0 : index
    %169 = vector.load %arg2[%168, %c0_37, %c0_38] : memref<8x8x128xbf16, #tpu.memory_space<vmem>>, vector<1x8x128xbf16>
    %170 = vector.shape_cast %169 : vector<1x8x128xbf16> to vector<8x128xbf16>
    %171 = arith.extf %170 : vector<8x128xbf16> to vector<8x128xf32>
    %172 = arith.addf %167, %171 : vector<8x128xf32>
    %173 = vector.extract_strided_slice %172 {offsets = [0, 0], sizes = [8, 32], strides = [1, 1]} : vector<8x128xf32> to vector<8x32xf32>
    %174 = arith.negf %173 : vector<8x32xf32>
    %175 = math.exp %174 : vector<8x32xf32>
    %cst_39 = arith.constant 1.000000e+00 : f32
    %176 = vector.broadcast %cst_39 : f32 to vector<8x32xf32>
    %177 = arith.addf %176, %175 : vector<8x32xf32>
    %178 = arith.divf %176, %177 : vector<8x32xf32>
    %179 = vector.extract_strided_slice %172 {offsets = [0, 32], sizes = [8, 32], strides = [1, 1]} : vector<8x128xf32> to vector<8x32xf32>
    %180 = arith.negf %179 : vector<8x32xf32>
    %181 = math.exp %180 : vector<8x32xf32>
    %cst_40 = arith.constant 1.000000e+00 : f32
    %182 = vector.broadcast %cst_40 : f32 to vector<8x32xf32>
    %183 = arith.addf %182, %181 : vector<8x32xf32>
    %184 = arith.divf %182, %183 : vector<8x32xf32>
    %185 = vector.extract_strided_slice %172 {offsets = [0, 64], sizes = [8, 32], strides = [1, 1]} : vector<8x128xf32> to vector<8x32xf32>
    %186 = math.tanh %185 : vector<8x32xf32>
    %187 = vector.extract_strided_slice %172 {offsets = [0, 96], sizes = [8, 32], strides = [1, 1]} : vector<8x128xf32> to vector<8x32xf32>
    %188 = arith.negf %187 : vector<8x32xf32>
    %189 = math.exp %188 : vector<8x32xf32>
    %cst_41 = arith.constant 1.000000e+00 : f32
    %190 = vector.broadcast %cst_41 : f32 to vector<8x32xf32>
    %191 = arith.addf %190, %189 : vector<8x32xf32>
    %192 = arith.divf %190, %191 : vector<8x32xf32>
    %193 = arith.mulf %184, %163 : vector<8x32xf32>
    %194 = arith.mulf %178, %186 : vector<8x32xf32>
    %195 = arith.addf %193, %194 : vector<8x32xf32>
    %196 = math.tanh %195 : vector<8x32xf32>
    %197 = arith.mulf %192, %196 : vector<8x32xf32>
    %c6_i32 = arith.constant 6 : i32
    %198 = arith.truncf %197 : vector<8x32xf32> to vector<8x32xbf16>
    %cst_42 = arith.constant dense<0.000000e+00> : vector<8x128xf32>
    %199 = tpu.matmul %198, %3, %cst_42 {dimension_numbers = #tpu.dot_dimension_numbers<[1], [0], [0], [1], [0, 0, 1, 1], [], []>} : vector<8x32xbf16>, vector<32x128xbf16>, vector<8x128xf32> -> vector<8x128xf32>
    %200 = arith.index_cast %c6_i32 : i32 to index
    %c0_43 = arith.constant 0 : index
    %c0_44 = arith.constant 0 : index
    %201 = vector.load %arg2[%200, %c0_43, %c0_44] : memref<8x8x128xbf16, #tpu.memory_space<vmem>>, vector<1x8x128xbf16>
    %202 = vector.shape_cast %201 : vector<1x8x128xbf16> to vector<8x128xbf16>
    %203 = arith.extf %202 : vector<8x128xbf16> to vector<8x128xf32>
    %204 = arith.addf %199, %203 : vector<8x128xf32>
    %205 = vector.extract_strided_slice %204 {offsets = [0, 0], sizes = [8, 32], strides = [1, 1]} : vector<8x128xf32> to vector<8x32xf32>
    %206 = arith.negf %205 : vector<8x32xf32>
    %207 = math.exp %206 : vector<8x32xf32>
    %cst_45 = arith.constant 1.000000e+00 : f32
    %208 = vector.broadcast %cst_45 : f32 to vector<8x32xf32>
    %209 = arith.addf %208, %207 : vector<8x32xf32>
    %210 = arith.divf %208, %209 : vector<8x32xf32>
    %211 = vector.extract_strided_slice %204 {offsets = [0, 32], sizes = [8, 32], strides = [1, 1]} : vector<8x128xf32> to vector<8x32xf32>
    %212 = arith.negf %211 : vector<8x32xf32>
    %213 = math.exp %212 : vector<8x32xf32>
    %cst_46 = arith.constant 1.000000e+00 : f32
    %214 = vector.broadcast %cst_46 : f32 to vector<8x32xf32>
    %215 = arith.addf %214, %213 : vector<8x32xf32>
    %216 = arith.divf %214, %215 : vector<8x32xf32>
    %217 = vector.extract_strided_slice %204 {offsets = [0, 64], sizes = [8, 32], strides = [1, 1]} : vector<8x128xf32> to vector<8x32xf32>
    %218 = math.tanh %217 : vector<8x32xf32>
    %219 = vector.extract_strided_slice %204 {offsets = [0, 96], sizes = [8, 32], strides = [1, 1]} : vector<8x128xf32> to vector<8x32xf32>
    %220 = arith.negf %219 : vector<8x32xf32>
    %221 = math.exp %220 : vector<8x32xf32>
    %cst_47 = arith.constant 1.000000e+00 : f32
    %222 = vector.broadcast %cst_47 : f32 to vector<8x32xf32>
    %223 = arith.addf %222, %221 : vector<8x32xf32>
    %224 = arith.divf %222, %223 : vector<8x32xf32>
    %225 = arith.mulf %216, %195 : vector<8x32xf32>
    %226 = arith.mulf %210, %218 : vector<8x32xf32>
    %227 = arith.addf %225, %226 : vector<8x32xf32>
    %228 = math.tanh %227 : vector<8x32xf32>
    %229 = arith.mulf %224, %228 : vector<8x32xf32>
    %c7_i32 = arith.constant 7 : i32
    %230 = arith.truncf %229 : vector<8x32xf32> to vector<8x32xbf16>
    %cst_48 = arith.constant dense<0.000000e+00> : vector<8x128xf32>
    %231 = tpu.matmul %230, %3, %cst_48 {dimension_numbers = #tpu.dot_dimension_numbers<[1], [0], [0], [1], [0, 0, 1, 1], [], []>} : vector<8x32xbf16>, vector<32x128xbf16>, vector<8x128xf32> -> vector<8x128xf32>
    %232 = arith.index_cast %c7_i32 : i32 to index
    %c0_49 = arith.constant 0 : index
    %c0_50 = arith.constant 0 : index
    %233 = vector.load %arg2[%232, %c0_49, %c0_50] : memref<8x8x128xbf16, #tpu.memory_space<vmem>>, vector<1x8x128xbf16>
    %234 = vector.shape_cast %233 : vector<1x8x128xbf16> to vector<8x128xbf16>
    %235 = arith.extf %234 : vector<8x128xbf16> to vector<8x128xf32>
    %236 = arith.addf %231, %235 : vector<8x128xf32>
    %237 = vector.extract_strided_slice %236 {offsets = [0, 0], sizes = [8, 32], strides = [1, 1]} : vector<8x128xf32> to vector<8x32xf32>
    %238 = arith.negf %237 : vector<8x32xf32>
    %239 = math.exp %238 : vector<8x32xf32>
    %cst_51 = arith.constant 1.000000e+00 : f32
    %240 = vector.broadcast %cst_51 : f32 to vector<8x32xf32>
    %241 = arith.addf %240, %239 : vector<8x32xf32>
    %242 = arith.divf %240, %241 : vector<8x32xf32>
    %243 = vector.extract_strided_slice %236 {offsets = [0, 32], sizes = [8, 32], strides = [1, 1]} : vector<8x128xf32> to vector<8x32xf32>
    %244 = arith.negf %243 : vector<8x32xf32>
    %245 = math.exp %244 : vector<8x32xf32>
    %cst_52 = arith.constant 1.000000e+00 : f32
    %246 = vector.broadcast %cst_52 : f32 to vector<8x32xf32>
    %247 = arith.addf %246, %245 : vector<8x32xf32>
    %248 = arith.divf %246, %247 : vector<8x32xf32>
    %249 = vector.extract_strided_slice %236 {offsets = [0, 64], sizes = [8, 32], strides = [1, 1]} : vector<8x128xf32> to vector<8x32xf32>
    %250 = math.tanh %249 : vector<8x32xf32>
    %251 = vector.extract_strided_slice %236 {offsets = [0, 96], sizes = [8, 32], strides = [1, 1]} : vector<8x128xf32> to vector<8x32xf32>
    %252 = arith.negf %251 : vector<8x32xf32>
    %253 = math.exp %252 : vector<8x32xf32>
    %cst_53 = arith.constant 1.000000e+00 : f32
    %254 = vector.broadcast %cst_53 : f32 to vector<8x32xf32>
    %255 = arith.addf %254, %253 : vector<8x32xf32>
    %256 = arith.divf %254, %255 : vector<8x32xf32>
    %257 = arith.mulf %248, %227 : vector<8x32xf32>
    %258 = arith.mulf %242, %250 : vector<8x32xf32>
    %259 = arith.addf %257, %258 : vector<8x32xf32>
    %260 = math.tanh %259 : vector<8x32xf32>
    %261 = arith.mulf %256, %260 : vector<8x32xf32>
    %c8_i32 = arith.constant 8 : i32
    %c0_54 = arith.constant 0 : index
    %c0_55 = arith.constant 0 : index
    %262 = vector.load %arg8[%c0_54, %c0_55] : memref<8x32xf32, #tpu.memory_space<vmem>>, vector<8x32xf32>
    tpu.vector_store %arg8[%c0_54, %c0_55], %261 {strides = array<i32>} : memref<8x32xf32, #tpu.memory_space<vmem>>, vector<8x32xf32>,
    %c0_56 = arith.constant 0 : index
    %c0_57 = arith.constant 0 : index
    %263 = vector.load %arg9[%c0_56, %c0_57] : memref<8x32xf32, #tpu.memory_space<vmem>>, vector<8x32xf32>
    tpu.vector_store %arg9[%c0_56, %c0_57], %259 {strides = array<i32>} : memref<8x32xf32, #tpu.memory_space<vmem>>, vector<8x32xf32>,
    %c0_i32_58 = arith.constant 0 : i32
    %264 = arith.cmpi eq, %arg1, %c0_i32_58 : i32
    %265 = arith.extui %264 : i1 to i32
    %c0_i32_59 = arith.constant 0 : i32
    %266 = arith.cmpi ne, %265, %c0_i32_59 : i32
    scf.if %266 {
      %c0_60 = arith.constant 0 : index
      %c0_61 = arith.constant 0 : index
      %267 = vector.load %arg6[%c0_60, %c0_61] : memref<8x32xf32, #tpu.memory_space<vmem>>, vector<8x32xf32>
      tpu.vector_store %arg6[%c0_60, %c0_61], %261 {strides = array<i32>} : memref<8x32xf32, #tpu.memory_space<vmem>>, vector<8x32xf32>,
      %c0_62 = arith.constant 0 : index
      %c0_63 = arith.constant 0 : index
      %268 = vector.load %arg7[%c0_62, %c0_63] : memref<8x32xf32, #tpu.memory_space<vmem>>, vector<8x32xf32>
      tpu.vector_store %arg7[%c0_62, %c0_63], %259 {strides = array<i32>} : memref<8x32xf32, #tpu.memory_space<vmem>>, vector<8x32xf32>,
      %c0_64 = arith.constant 0 : index
      %c0_65 = arith.constant 0 : index
      %269 = vector.load %arg4[%c0_64, %c0_65] : memref<1x32xf32, #tpu.memory_space<vmem>>, vector<1x32xf32>
      %270 = vector.broadcast %269 : vector<1x32xf32> to vector<8x32xf32>
      %271 = arith.mulf %261, %270 : vector<8x32xf32>
      %cst_66 = arith.constant dense<0.000000e+00> : vector<8xf32>
      %272 = vector.multi_reduction <add>, %271, %cst_66 [1] : vector<8x32xf32> to vector<8xf32>
      %273 = vector.shape_cast %272 : vector<8xf32> to vector<8x1xf32>
      %c0_67 = arith.constant 0 : index
      %c0_68 = arith.constant 0 : index
      %274 = vector.load %arg5[%c0_67, %c0_68] : memref<8x1xf32, #tpu.memory_space<vmem>>, vector<8x1xf32>
      tpu.vector_store %arg5[%c0_67, %c0_68], %273 {strides = array<i32>} : memref<8x1xf32, #tpu.memory_space<vmem>>, vector<8x1xf32>,
    } else {
    }
    return
  }
  func.func @transform_0(%arg0: i32, %arg1: i32) -> (i32, i32, i32) {
    %c0_i32 = arith.constant 0 : i32
    %c0_i32_0 = arith.constant 0 : i32
    return %arg1, %arg0, %c0_i32 : i32, i32, i32
  }
  func.func @transform_1(%arg0: i32, %arg1: i32) -> (i32, i32) {
    %c0_i32 = arith.constant 0 : i32
    %c0_i32_0 = arith.constant 0 : i32
    %c0_i32_1 = arith.constant 0 : i32
    return %c0_i32, %c0_i32_0 : i32, i32
  }
  func.func @transform_2(%arg0: i32, %arg1: i32) -> (i32, i32) {
    %c0_i32 = arith.constant 0 : i32
    %c0_i32_0 = arith.constant 0 : i32
    %c0_i32_1 = arith.constant 0 : i32
    return %c0_i32, %c0_i32_0 : i32, i32
  }
  func.func @transform_3(%arg0: i32, %arg1: i32) -> (i32, i32) {
    %c0_i32 = arith.constant 0 : i32
    %c0_i32_0 = arith.constant 0 : i32
    return %arg0, %c0_i32 : i32, i32
  }
  func.func @transform_4(%arg0: i32, %arg1: i32) -> (i32, i32) {
    %c0_i32 = arith.constant 0 : i32
    %c0_i32_0 = arith.constant 0 : i32
    return %arg0, %c0_i32 : i32, i32
  }
  func.func @transform_5(%arg0: i32, %arg1: i32) -> (i32, i32) {
    %c0_i32 = arith.constant 0 : i32
    %c0_i32_0 = arith.constant 0 : i32
    return %arg0, %c0_i32 : i32, i32
  }
}

</mosaic_0001>

<llo_original>
// kernel: tpu_custom_call.1
$region0: #{tpu_custom_call.1}
  #allocation0 [shape = 'u32[]', space=smem, size = 0x4, offset = 0x4, fixed_abs, tag = 'smem constant byte address 0x4 - core index']
  #allocation1 [shape = 'u32[144,128]{1,0:T(1,128)}', space=vmem, size = 0x12000, scoped, tag = 'internal scratch']
  #allocation2 [shape = 'f32[8,32]{1,0:T(8,128)}', space=vmem, size = 0x1000, scoped, tag = 'scratch operand']
  #allocation3 [shape = 'f32[8,32]{1,0:T(8,128)}', space=vmem, size = 0x1000, scoped, tag = 'scratch operand']
  %s0 = inlined_call_operand.hbm [shape: bf16[8,8,128], index: 0, kind: input, shape index: {}]
  %s1 = inlined_call_operand.hbm [shape: bf16[32,128], index: 1, kind: input, shape index: {}]
  %s2 = inlined_call_operand.vmem [shape: f32[1,32], index: 2, kind: input, shape index: {}]
  %s3 = inlined_call_operand.vmem [shape: f32[8,1], index: 3, kind: output, shape index: {0}]
  %s4 = inlined_call_operand.hbm [shape: f32[8,32], index: 4, kind: output, shape index: {1}]
  %s5 = inlined_call_operand.hbm [shape: f32[8,32], index: 5, kind: output, shape index: {2}]
  %6 = xla_tuple %s3, %s4, %s5
  %s7 = sld [smem:[#allocation0]]
  $region54: #{tpu_custom_call.1} parent=0
    _
  %s9 = ssub.s32 1, %s7
  %s10 = scalar_select 0, %s9, %s7
  $region1: #{tpu_custom_call.1} parent=0
    #allocation4 [shape = 'u8[16384]{0}', space=vmem, size = 0x4000, scoped, tag = 'input window, operand 0, single buffered']
    #allocation5 [shape = 's32[1]{0}', space=sflag, size = 0x4, scoped, tag = 'scoped memory for tpu_custom_call.1']
    #allocation6 [shape = 's32[1]{0}', space=sflag, size = 0x4, scoped, tag = 'scoped memory for tpu_custom_call.1']
    #allocation7 [shape = 'u8[8192]{0}', space=vmem, size = 0x2000, scoped, tag = 'input window, operand 1, single buffered']
    #allocation8 [shape = 's32[1]{0}', space=sflag, size = 0x4, scoped, tag = 'scoped memory for tpu_custom_call.1']
    #allocation9 [shape = 'u8[4096]{0}', space=vmem, size = 0x1000, scoped, tag = 'output window, operand 1, single buffered']
    #allocation10 [shape = 'u8[4096]{0}', space=vmem, size = 0x1000, scoped, tag = 'output window, operand 2, single buffered']
    #allocation11 [shape = 's32[1]{0}', space=sflag, size = 0x4, scoped, tag = 'scoped memory for tpu_custom_call.1']
    %11 = vsyncpa [#allocation5], 0
    %12 = vsyncpa [#allocation8], 0
    %13 = vsyncpa [#allocation6], 0
    %14 = vsyncpa [#allocation11], 0
    // Predicated region
    $region2: #{tpu_custom_call.1} parent=1 // pred_check
      _
    $region3: #{tpu_custom_call.1} parent=1 // pred_check_branch
      %16 = sbr.rel (0) target = $region5
    $region4: #{tpu_custom_call.1} parent=1 // pred_region
      %s18 = ssub.s32 512, 512
      %19 = vsyncadd [#allocation5], %s18
      %s20 = sshll.u32 [#allocation4], 4
      %s21 = int_to_ptr.vmem [resolvable:$true] %s20
      %26 = dma.hbm_to_vmem [thread:$0]  %s0, 512, %s21, [#allocation5], 64, 64, 4
    $region5: #{tpu_custom_call.1} parent=1 // pred_fallthru
      _
    // Predicated region
    $region6: #{tpu_custom_call.1} parent=1 // pred_check
      _
    $region7: #{tpu_custom_call.1} parent=1 // pred_check_branch
      %28 = sbr.rel (0) target = $region9
    $region8: #{tpu_custom_call.1} parent=1 // pred_region
      %s30 = ssub.s32 256, 256
      %31 = vsyncadd [#allocation8], %s30
      %s32 = sshll.u32 [#allocation7], 4
      %s33 = int_to_ptr.vmem [resolvable:$true] %s32
      %38 = dma.hbm_to_vmem [thread:$0]  %s1, 256, %s33, [#allocation8], 64, 64, 4
    $region9: #{tpu_custom_call.1} parent=1 // pred_fallthru
      _
    // Predicated region
    $region10: #{tpu_custom_call.1} parent=1 // pred_check
      _
    $region11: #{tpu_custom_call.1} parent=1 // pred_check_branch
      %40 = sbr.rel (0) target = $region13
    $region12: #{tpu_custom_call.1} parent=1 // pred_region
      _
    $region13: #{tpu_custom_call.1} parent=1 // pred_fallthru
      _
    // Predicated region
    $region14: #{tpu_custom_call.1} parent=1 // pred_check
      _
    $region15: #{tpu_custom_call.1} parent=1 // pred_check_branch
      %42 = sbr.rel (0) target = $region17
    $region16: #{tpu_custom_call.1} parent=1 // pred_region
      %43 = dma.done [#allocation5], 512
    $region17: #{tpu_custom_call.1} parent=1 // pred_fallthru
      _
    // Predicated region
    $region18: #{tpu_custom_call.1} parent=1 // pred_check
      _
    $region19: #{tpu_custom_call.1} parent=1 // pred_check_branch
      %45 = sbr.rel (0) target = $region21
    $region20: #{tpu_custom_call.1} parent=1 // pred_region
      %46 = dma.done [#allocation8], 256
    $region21: #{tpu_custom_call.1} parent=1 // pred_fallthru
      _
    %p48 = scmp.eq.s32.totalorder 0, 0
    // Predicated region
    $region22: #{tpu_custom_call.1} parent=1 // pred_check
      %p49 = pneg %p48
    $region23: #{tpu_custom_call.1} parent=1 // pred_check_branch
      %51 = sbr.rel (%p49) target = $region25
    $region24: #{tpu_custom_call.1} parent=1 // pred_region
      %vm52 = vcmask 261120
      %53 = vst.msk [vmem:[#allocation2] sm:$0xff] %vm52, 0.0
      %54 = vst.msk [vmem:[#allocation3] sm:$0xff] %vm52, 0.0
    $region25: #{tpu_custom_call.1} parent=1 // pred_fallthru
      _
    %v55 = vld [vmem:[#allocation7] sm:$0xf]
    %v56 = vld [vmem:[#allocation7 + $0x4] sm:$0xf]
    %v57 = vld [vmem:[#allocation7 + $0x8] sm:$0xf]
    %v58 = vld [vmem:[#allocation7 + $0xc] sm:$0xf]
    %v59 = vld [vmem:[#allocation2] sm:$0xff]
    %v60 = vld [vmem:[#allocation3] sm:$0xff]
    %v61 = vpack.c.bf16 %v59, %v59
    %v62 = vld [vmem:[#allocation4] sm:$0xf]
    %v63 = vunpack.c.l.bf16 %v62
    %v68 = vunpack.c.l.b16 %v55
    %v69 = vunpack.c.l.b16 %v56
    %v70 = vunpack.c.l.b16 %v57
    %v71 = vunpack.c.l.b16 %v58
    %v72 = vpack.c.b16 %v69, %v68
    %v73 = vpack.c.b16 %v71, %v70
    %vm76 = vcmask 261120
    %v78 = vsel %vm76, %v61, 0
    %80 = vmatprep.subr.bf16.mxu0 0
    %81 = vmatpush1.bf16.msra.mxu0 0
    %82 = vmatprep.subr.bf16.mxu0 0
    %83 = vmatpush1.bf16.msra.mxu0 0
    %84 = vmatprep.subr.bf16.mxu0 0
    %85 = vmatpush1.bf16.msra.mxu0 0
    %86 = vmatprep.subr.bf16.mxu0 0
    %87 = vmatpush1.bf16.msra.mxu0 0
    %88 = vmatprep.subr.bf16.mxu0 0
    %89 = vmatpush1.bf16.msra.mxu0 0
    %90 = vmatprep.subr.bf16.mxu0 0
    %91 = vmatpush1.bf16.msra.mxu0 0
    %92 = vmatprep.subr.bf16.mxu0 0
    %93 = vmatpush1.bf16.msra.mxu0 %v73
    %94 = vmatprep.subr.bf16.mxu0 0
    %95 = vmatpush1.bf16.msra.mxu0 %v72
    %96 = vmatprep.subr.bf16.mxu0 0
    %97 = vmatpush2.bf16.msra.mxu0 0
    %98 = vmatprep.subr.bf16.mxu0 0
    %99 = vmatpush2.bf16.msra.mxu0 0
    %100 = vmatprep.subr.bf16.mxu0 0
    %101 = vmatpush2.bf16.msra.mxu0 0
    %102 = vmatprep.subr.bf16.mxu0 0
    %103 = vmatpush2.bf16.msra.mxu0 0
    %104 = vmatprep.subr.bf16.mxu0 0
    %105 = vmatpush2.bf16.msra.mxu0 0
    %106 = vmatprep.subr.bf16.mxu0 0
    %107 = vmatpush2.bf16.msra.mxu0 0
    %108 = vmatprep.subr.bf16.mxu0 0
    %109 = vmatpush2.bf16.msra.mxu0 0
    %110 = vmatprep.subr.bf16.mxu0 0
    %111 = vmatpush2.bf16.msra.mxu0 0
    %112 = vmatprep.mubr.bf16.mxu0 0
    %113 = vmatmul.mubr.bf16.gmra.mxu0 %v78
    %v114 = vpop.f32.mrf.mxu0
    %v115 = vadd.f32 %v63, %v114
    %v116 = vpop.f32.mrf.mxu0
    %v117 = vpop.f32.mrf.mxu0
    %v118 = vpop.f32.mrf.mxu0
    %119 = vdwg.mxu0
    %v120 = vxor.u32 %v115, 2147483648
    %v121 = vmul.f32 %v120, 1.442695
    %v122 = vpow.pop %v121
    %v123 = vadd.f32 %v122, 1.0
    %v124 = vrcp.pop %v123
    %v125 = vmul.f32 1.0, %v124
    %v126 = vtanh.pop %v115
    %128 = vrot.lane.b32.xlu0 %v60, 32
    %v129 = vpop.permute.xlu0 %128
    %v131 = vmul.f32 %v125, %v129
    %133 = vrot.lane.b32.xlu0 %v126, 64
    %v134 = vpop.permute.xlu0 %133
    %v136 = vmul.f32 %v125, %v134
    %138 = vrot.lane.b32.xlu0 %v136, 32
    %v139 = vpop.permute.xlu0 %138
    %v141 = vadd.f32 %v131, %v139
    %v142 = vtanh.pop %v141
    %144 = vrot.lane.b32.xlu0 %v142, 64
    %v145 = vpop.permute.xlu0 %144
    %v147 = vmul.f32 %v125, %v145
    %v148 = vpack.c.bf16 %v147, %v147
    %s149 = scalar_lea.vmem [#allocation4], 4
    %v150 = vld [vmem:[%s149] sm:$0xf]
    %v151 = vunpack.c.l.bf16 %v150
    %153 = vrot.lane.b32.xlu0 %v148, 32
    %v154 = vpop.permute.xlu0 %153
    %v156 = vsel %vm76, %v154, 0
    %158 = vmatprep.subr.bf16.mxu0 0
    %159 = vmatpush1.bf16.msra.mxu0 0
    %160 = vmatprep.subr.bf16.mxu0 0
    %161 = vmatpush1.bf16.msra.mxu0 0
    %162 = vmatprep.subr.bf16.mxu0 0
    %163 = vmatpush1.bf16.msra.mxu0 0
    %164 = vmatprep.subr.bf16.mxu0 0
    %165 = vmatpush1.bf16.msra.mxu0 0
    %166 = vmatprep.subr.bf16.mxu0 0
    %167 = vmatpush1.bf16.msra.mxu0 0
    %168 = vmatprep.subr.bf16.mxu0 0
    %169 = vmatpush1.bf16.msra.mxu0 0
    %170 = vmatprep.subr.bf16.mxu0 0
    %171 = vmatpush1.bf16.msra.mxu0 %v73
    %172 = vmatprep.subr.bf16.mxu0 0
    %173 = vmatpush1.bf16.msra.mxu0 %v72
    %174 = vmatprep.subr.bf16.mxu0 0
    %175 = vmatpush2.bf16.msra.mxu0 0
    %176 = vmatprep.subr.bf16.mxu0 0
    %177 = vmatpush2.bf16.msra.mxu0 0
    %178 = vmatprep.subr.bf16.mxu0 0
    %179 = vmatpush2.bf16.msra.mxu0 0
    %180 = vmatprep.subr.bf16.mxu0 0
    %181 = vmatpush2.bf16.msra.mxu0 0
    %182 = vmatprep.subr.bf16.mxu0 0
    %183 = vmatpush2.bf16.msra.mxu0 0
    %184 = vmatprep.subr.bf16.mxu0 0
    %185 = vmatpush2.bf16.msra.mxu0 0
    %186 = vmatprep.subr.bf16.mxu0 0
    %187 = vmatpush2.bf16.msra.mxu0 0
    %188 = vmatprep.subr.bf16.mxu0 0
    %189 = vmatpush2.bf16.msra.mxu0 0
    %190 = vmatprep.mubr.bf16.mxu0 0
    %191 = vmatmul.mubr.bf16.gmra.mxu0 %v156
    %v192 = vpop.f32.mrf.mxu0
    %v193 = vadd.f32 %v151, %v192
    %v194 = vpop.f32.mrf.mxu0
    %v195 = vpop.f32.mrf.mxu0
    %v196 = vpop.f32.mrf.mxu0
    %197 = vdwg.mxu0
    %v198 = vxor.u32 %v193, 2147483648
    %v199 = vmul.f32 %v198, 1.442695
    %v200 = vpow.pop %v199
    %v201 = vadd.f32 %v200, 1.0
    %v202 = vrcp.pop %v201
    %v203 = vmul.f32 1.0, %v202
    %v204 = vtanh.pop %v193
    %v205 = vmul.f32 %v203, %v141
    %207 = vrot.lane.b32.xlu0 %v204, 64
    %v208 = vpop.permute.xlu0 %207
    %v210 = vmul.f32 %v203, %v208
    %212 = vrot.lane.b32.xlu0 %v210, 32
    %v213 = vpop.permute.xlu0 %212
    %v215 = vadd.f32 %v205, %v213
    %v216 = vtanh.pop %v215
    %218 = vrot.lane.b32.xlu0 %v216, 64
    %v219 = vpop.permute.xlu0 %218
    %v221 = vmul.f32 %v203, %v219
    %v222 = vpack.c.bf16 %v221, %v221
    %s223 = scalar_lea.vmem [#allocation4], 8
    %v224 = vld [vmem:[%s223] sm:$0xf]
    %v225 = vunpack.c.l.bf16 %v224
    %227 = vrot.lane.b32.xlu0 %v222, 32
    %v228 = vpop.permute.xlu0 %227
    %v230 = vsel %vm76, %v228, 0
    %232 = vmatprep.subr.bf16.mxu0 0
    %233 = vmatpush1.bf16.msra.mxu0 0
    %234 = vmatprep.subr.bf16.mxu0 0
    %235 = vmatpush1.bf16.msra.mxu0 0
    %236 = vmatprep.subr.bf16.mxu0 0
    %237 = vmatpush1.bf16.msra.mxu0 0
    %238 = vmatprep.subr.bf16.mxu0 0
    %239 = vmatpush1.bf16.msra.mxu0 0
    %240 = vmatprep.subr.bf16.mxu0 0
    %241 = vmatpush1.bf16.msra.mxu0 0
    %242 = vmatprep.subr.bf16.mxu0 0
    %243 = vmatpush1.bf16.msra.mxu0 0
    %244 = vmatprep.subr.bf16.mxu0 0
    %245 = vmatpush1.bf16.msra.mxu0 %v73
    %246 = vmatprep.subr.bf16.mxu0 0
    %247 = vmatpush1.bf16.msra.mxu0 %v72
    %248 = vmatprep.subr.bf16.mxu0 0
    %249 = vmatpush2.bf16.msra.mxu0 0
    %250 = vmatprep.subr.bf16.mxu0 0
    %251 = vmatpush2.bf16.msra.mxu0 0
    %252 = vmatprep.subr.bf16.mxu0 0
    %253 = vmatpush2.bf16.msra.mxu0 0
    %254 = vmatprep.subr.bf16.mxu0 0
    %255 = vmatpush2.bf16.msra.mxu0 0
    %256 = vmatprep.subr.bf16.mxu0 0
    %257 = vmatpush2.bf16.msra.mxu0 0
    %258 = vmatprep.subr.bf16.mxu0 0
    %259 = vmatpush2.bf16.msra.mxu0 0
    %260 = vmatprep.subr.bf16.mxu0 0
    %261 = vmatpush2.bf16.msra.mxu0 0
    %262 = vmatprep.subr.bf16.mxu0 0
    %263 = vmatpush2.bf16.msra.mxu0 0
    %264 = vmatprep.mubr.bf16.mxu0 0
    %265 = vmatmul.mubr.bf16.gmra.mxu0 %v230
    %v266 = vpop.f32.mrf.mxu0
    %v267 = vadd.f32 %v225, %v266
    %v268 = vpop.f32.mrf.mxu0
    %v269 = vpop.f32.mrf.mxu0
    %v270 = vpop.f32.mrf.mxu0
    %271 = vdwg.mxu0
    %v272 = vxor.u32 %v267, 2147483648
    %v273 = vmul.f32 %v272, 1.442695
    %v274 = vpow.pop %v273
    %v275 = vadd.f32 %v274, 1.0
    %v276 = vrcp.pop %v275
    %v277 = vmul.f32 1.0, %v276
    %v278 = vtanh.pop %v267
    %v279 = vmul.f32 %v277, %v215
    %281 = vrot.lane.b32.xlu0 %v278, 64
    %v282 = vpop.permute.xlu0 %281
    %v284 = vmul.f32 %v277, %v282
    %286 = vrot.lane.b32.xlu0 %v284, 32
    %v287 = vpop.permute.xlu0 %286
    %v289 = vadd.f32 %v279, %v287
    %v290 = vtanh.pop %v289
    %292 = vrot.lane.b32.xlu0 %v290, 64
    %v293 = vpop.permute.xlu0 %292
    %v295 = vmul.f32 %v277, %v293
    %v296 = vpack.c.bf16 %v295, %v295
    %s297 = scalar_lea.vmem [#allocation4], 12
    %v298 = vld [vmem:[%s297] sm:$0xf]
    %v299 = vunpack.c.l.bf16 %v298
    %301 = vrot.lane.b32.xlu0 %v296, 32
    %v302 = vpop.permute.xlu0 %301
    %v304 = vsel %vm76, %v302, 0
    %306 = vmatprep.subr.bf16.mxu0 0
    %307 = vmatpush1.bf16.msra.mxu0 0
    %308 = vmatprep.subr.bf16.mxu0 0
    %309 = vmatpush1.bf16.msra.mxu0 0
    %310 = vmatprep.subr.bf16.mxu0 0
    %311 = vmatpush1.bf16.msra.mxu0 0
    %312 = vmatprep.subr.bf16.mxu0 0
    %313 = vmatpush1.bf16.msra.mxu0 0
    %314 = vmatprep.subr.bf16.mxu0 0
    %315 = vmatpush1.bf16.msra.mxu0 0
    %316 = vmatprep.subr.bf16.mxu0 0
    %317 = vmatpush1.bf16.msra.mxu0 0
    %318 = vmatprep.subr.bf16.mxu0 0
    %319 = vmatpush1.bf16.msra.mxu0 %v73
    %320 = vmatprep.subr.bf16.mxu0 0
    %321 = vmatpush1.bf16.msra.mxu0 %v72
    %322 = vmatprep.subr.bf16.mxu0 0
    %323 = vmatpush2.bf16.msra.mxu0 0
    %324 = vmatprep.subr.bf16.mxu0 0
    %325 = vmatpush2.bf16.msra.mxu0 0
    %326 = vmatprep.subr.bf16.mxu0 0
    %327 = vmatpush2.bf16.msra.mxu0 0
    %328 = vmatprep.subr.bf16.mxu0 0
    %329 = vmatpush2.bf16.msra.mxu0 0
    %330 = vmatprep.subr.bf16.mxu0 0
    %331 = vmatpush2.bf16.msra.mxu0 0
    %332 = vmatprep.subr.bf16.mxu0 0
    %333 = vmatpush2.bf16.msra.mxu0 0
    %334 = vmatprep.subr.bf16.mxu0 0
    %335 = vmatpush2.bf16.msra.mxu0 0
    %336 = vmatprep.subr.bf16.mxu0 0
    %337 = vmatpush2.bf16.msra.mxu0 0
    %338 = vmatprep.mubr.bf16.mxu0 0
    %339 = vmatmul.mubr.bf16.gmra.mxu0 %v304
    %v340 = vpop.f32.mrf.mxu0
    %v341 = vadd.f32 %v299, %v340
    %v342 = vpop.f32.mrf.mxu0
    %v343 = vpop.f32.mrf.mxu0
    %v344 = vpop.f32.mrf.mxu0
    %345 = vdwg.mxu0
    %v346 = vxor.u32 %v341, 2147483648
    %v347 = vmul.f32 %v346, 1.442695
    %v348 = vpow.pop %v347
    %v349 = vadd.f32 %v348, 1.0
    %v350 = vrcp.pop %v349
    %v351 = vmul.f32 1.0, %v350
    %v352 = vtanh.pop %v341
    %v353 = vmul.f32 %v351, %v289
    %355 = vrot.lane.b32.xlu0 %v352, 64
    %v356 = vpop.permute.xlu0 %355
    %v358 = vmul.f32 %v351, %v356
    %360 = vrot.lane.b32.xlu0 %v358, 32
    %v361 = vpop.permute.xlu0 %360
    %v363 = vadd.f32 %v353, %v361
    %v364 = vtanh.pop %v363
    %366 = vrot.lane.b32.xlu0 %v364, 64
    %v367 = vpop.permute.xlu0 %366
    %v369 = vmul.f32 %v351, %v367
    %v370 = vpack.c.bf16 %v369, %v369
    %s371 = scalar_lea.vmem [#allocation4], 16
    %v372 = vld [vmem:[%s371] sm:$0xf]
    %v373 = vunpack.c.l.bf16 %v372
    %375 = vrot.lane.b32.xlu0 %v370, 32
    %v376 = vpop.permute.xlu0 %375
    %v378 = vsel %vm76, %v376, 0
    %380 = vmatprep.subr.bf16.mxu0 0
    %381 = vmatpush1.bf16.msra.mxu0 0
    %382 = vmatprep.subr.bf16.mxu0 0
    %383 = vmatpush1.bf16.msra.mxu0 0
    %384 = vmatprep.subr.bf16.mxu0 0
    %385 = vmatpush1.bf16.msra.mxu0 0
    %386 = vmatprep.subr.bf16.mxu0 0
    %387 = vmatpush1.bf16.msra.mxu0 0
    %388 = vmatprep.subr.bf16.mxu0 0
    %389 = vmatpush1.bf16.msra.mxu0 0
    %390 = vmatprep.subr.bf16.mxu0 0
    %391 = vmatpush1.bf16.msra.mxu0 0
    %392 = vmatprep.subr.bf16.mxu0 0
    %393 = vmatpush1.bf16.msra.mxu0 %v73
    %394 = vmatprep.subr.bf16.mxu0 0
    %395 = vmatpush1.bf16.msra.mxu0 %v72
    %396 = vmatprep.subr.bf16.mxu0 0
    %397 = vmatpush2.bf16.msra.mxu0 0
    %398 = vmatprep.subr.bf16.mxu0 0
    %399 = vmatpush2.bf16.msra.mxu0 0
    %400 = vmatprep.subr.bf16.mxu0 0
    %401 = vmatpush2.bf16.msra.mxu0 0
    %402 = vmatprep.subr.bf16.mxu0 0
    %403 = vmatpush2.bf16.msra.mxu0 0
    %404 = vmatprep.subr.bf16.mxu0 0
    %405 = vmatpush2.bf16.msra.mxu0 0
    %406 = vmatprep.subr.bf16.mxu0 0
    %407 = vmatpush2.bf16.msra.mxu0 0
    %408 = vmatprep.subr.bf16.mxu0 0
    %409 = vmatpush2.bf16.msra.mxu0 0
    %410 = vmatprep.subr.bf16.mxu0 0
    %411 = vmatpush2.bf16.msra.mxu0 0
    %412 = vmatprep.mubr.bf16.mxu0 0
    %413 = vmatmul.mubr.bf16.gmra.mxu0 %v378
    %v414 = vpop.f32.mrf.mxu0
    %v415 = vadd.f32 %v373, %v414
    %v416 = vpop.f32.mrf.mxu0
    %v417 = vpop.f32.mrf.mxu0
    %v418 = vpop.f32.mrf.mxu0
    %419 = vdwg.mxu0
    %v420 = vxor.u32 %v415, 2147483648
    %v421 = vmul.f32 %v420, 1.442695
    %v422 = vpow.pop %v421
    %v423 = vadd.f32 %v422, 1.0
    %v424 = vrcp.pop %v423
    %v425 = vmul.f32 1.0, %v424
    %v426 = vtanh.pop %v415
    %v427 = vmul.f32 %v425, %v363
    %429 = vrot.lane.b32.xlu0 %v426, 64
    %v430 = vpop.permute.xlu0 %429
    %v432 = vmul.f32 %v425, %v430
    %434 = vrot.lane.b32.xlu0 %v432, 32
    %v435 = vpop.permute.xlu0 %434
    %v437 = vadd.f32 %v427, %v435
    %v438 = vtanh.pop %v437
    %440 = vrot.lane.b32.xlu0 %v438, 64
    %v441 = vpop.permute.xlu0 %440
    %v443 = vmul.f32 %v425, %v441
    %v444 = vpack.c.bf16 %v443, %v443
    %s445 = scalar_lea.vmem [#allocation4], 20
    %v446 = vld [vmem:[%s445] sm:$0xf]
    %v447 = vunpack.c.l.bf16 %v446
    %449 = vrot.lane.b32.xlu0 %v444, 32
    %v450 = vpop.permute.xlu0 %449
    %v452 = vsel %vm76, %v450, 0
    %454 = vmatprep.subr.bf16.mxu0 0
    %455 = vmatpush1.bf16.msra.mxu0 0
    %456 = vmatprep.subr.bf16.mxu0 0
    %457 = vmatpush1.bf16.msra.mxu0 0
    %458 = vmatprep.subr.bf16.mxu0 0
    %459 = vmatpush1.bf16.msra.mxu0 0
    %460 = vmatprep.subr.bf16.mxu0 0
    %461 = vmatpush1.bf16.msra.mxu0 0
    %462 = vmatprep.subr.bf16.mxu0 0
    %463 = vmatpush1.bf16.msra.mxu0 0
    %464 = vmatprep.subr.bf16.mxu0 0
    %465 = vmatpush1.bf16.msra.mxu0 0
    %466 = vmatprep.subr.bf16.mxu0 0
    %467 = vmatpush1.bf16.msra.mxu0 %v73
    %468 = vmatprep.subr.bf16.mxu0 0
    %469 = vmatpush1.bf16.msra.mxu0 %v72
    %470 = vmatprep.subr.bf16.mxu0 0
    %471 = vmatpush2.bf16.msra.mxu0 0
    %472 = vmatprep.subr.bf16.mxu0 0
    %473 = vmatpush2.bf16.msra.mxu0 0
    %474 = vmatprep.subr.bf16.mxu0 0
    %475 = vmatpush2.bf16.msra.mxu0 0
    %476 = vmatprep.subr.bf16.mxu0 0
    %477 = vmatpush2.bf16.msra.mxu0 0
    %478 = vmatprep.subr.bf16.mxu0 0
    %479 = vmatpush2.bf16.msra.mxu0 0
    %480 = vmatprep.subr.bf16.mxu0 0
    %481 = vmatpush2.bf16.msra.mxu0 0
    %482 = vmatprep.subr.bf16.mxu0 0
    %483 = vmatpush2.bf16.msra.mxu0 0
    %484 = vmatprep.subr.bf16.mxu0 0
    %485 = vmatpush2.bf16.msra.mxu0 0
    %486 = vmatprep.mubr.bf16.mxu0 0
    %487 = vmatmul.mubr.bf16.gmra.mxu0 %v452
    %v488 = vpop.f32.mrf.mxu0
    %v489 = vadd.f32 %v447, %v488
    %v490 = vpop.f32.mrf.mxu0
    %v491 = vpop.f32.mrf.mxu0
    %v492 = vpop.f32.mrf.mxu0
    %493 = vdwg.mxu0
    %v494 = vxor.u32 %v489, 2147483648
    %v495 = vmul.f32 %v494, 1.442695
    %v496 = vpow.pop %v495
    %v497 = vadd.f32 %v496, 1.0
    %v498 = vrcp.pop %v497
    %v499 = vmul.f32 1.0, %v498
    %v500 = vtanh.pop %v489
    %v501 = vmul.f32 %v499, %v437
    %503 = vrot.lane.b32.xlu0 %v500, 64
    %v504 = vpop.permute.xlu0 %503
    %v506 = vmul.f32 %v499, %v504
    %508 = vrot.lane.b32.xlu0 %v506, 32
    %v509 = vpop.permute.xlu0 %508
    %v511 = vadd.f32 %v501, %v509
    %v512 = vtanh.pop %v511
    %514 = vrot.lane.b32.xlu0 %v512, 64
    %v515 = vpop.permute.xlu0 %514
    %v517 = vmul.f32 %v499, %v515
    %v518 = vpack.c.bf16 %v517, %v517
    %s519 = scalar_lea.vmem [#allocation4], 24
    %v520 = vld [vmem:[%s519] sm:$0xf]
    %v521 = vunpack.c.l.bf16 %v520
    %523 = vrot.lane.b32.xlu0 %v518, 32
    %v524 = vpop.permute.xlu0 %523
    %v526 = vsel %vm76, %v524, 0
    %528 = vmatprep.subr.bf16.mxu0 0
    %529 = vmatpush1.bf16.msra.mxu0 0
    %530 = vmatprep.subr.bf16.mxu0 0
    %531 = vmatpush1.bf16.msra.mxu0 0
    %532 = vmatprep.subr.bf16.mxu0 0
    %533 = vmatpush1.bf16.msra.mxu0 0
    %534 = vmatprep.subr.bf16.mxu0 0
    %535 = vmatpush1.bf16.msra.mxu0 0
    %536 = vmatprep.subr.bf16.mxu0 0
    %537 = vmatpush1.bf16.msra.mxu0 0
    %538 = vmatprep.subr.bf16.mxu0 0
    %539 = vmatpush1.bf16.msra.mxu0 0
    %540 = vmatprep.subr.bf16.mxu0 0
    %541 = vmatpush1.bf16.msra.mxu0 %v73
    %542 = vmatprep.subr.bf16.mxu0 0
    %543 = vmatpush1.bf16.msra.mxu0 %v72
    %544 = vmatprep.subr.bf16.mxu0 0
    %545 = vmatpush2.bf16.msra.mxu0 0
    %546 = vmatprep.subr.bf16.mxu0 0
    %547 = vmatpush2.bf16.msra.mxu0 0
    %548 = vmatprep.subr.bf16.mxu0 0
    %549 = vmatpush2.bf16.msra.mxu0 0
    %550 = vmatprep.subr.bf16.mxu0 0
    %551 = vmatpush2.bf16.msra.mxu0 0
    %552 = vmatprep.subr.bf16.mxu0 0
    %553 = vmatpush2.bf16.msra.mxu0 0
    %554 = vmatprep.subr.bf16.mxu0 0
    %555 = vmatpush2.bf16.msra.mxu0 0
    %556 = vmatprep.subr.bf16.mxu0 0
    %557 = vmatpush2.bf16.msra.mxu0 0
    %558 = vmatprep.subr.bf16.mxu0 0
    %559 = vmatpush2.bf16.msra.mxu0 0
    %560 = vmatprep.mubr.bf16.mxu0 0
    %561 = vmatmul.mubr.bf16.gmra.mxu0 %v526
    %v562 = vpop.f32.mrf.mxu0
    %v563 = vadd.f32 %v521, %v562
    %v564 = vpop.f32.mrf.mxu0
    %v565 = vpop.f32.mrf.mxu0
    %v566 = vpop.f32.mrf.mxu0
    %567 = vdwg.mxu0
    %v568 = vxor.u32 %v563, 2147483648
    %v569 = vmul.f32 %v568, 1.442695
    %v570 = vpow.pop %v569
    %v571 = vadd.f32 %v570, 1.0
    %v572 = vrcp.pop %v571
    %v573 = vmul.f32 1.0, %v572
    %v574 = vtanh.pop %v563
    %v575 = vmul.f32 %v573, %v511
    %577 = vrot.lane.b32.xlu0 %v574, 64
    %v578 = vpop.permute.xlu0 %577
    %v580 = vmul.f32 %v573, %v578
    %582 = vrot.lane.b32.xlu0 %v580, 32
    %v583 = vpop.permute.xlu0 %582
    %v585 = vadd.f32 %v575, %v583
    %v586 = vtanh.pop %v585
    %588 = vrot.lane.b32.xlu0 %v586, 64
    %v589 = vpop.permute.xlu0 %588
    %v591 = vmul.f32 %v573, %v589
    %v592 = vpack.c.bf16 %v591, %v591
    %s593 = scalar_lea.vmem [#allocation4], 28
    %v594 = vld [vmem:[%s593] sm:$0xf]
    %v595 = vunpack.c.l.bf16 %v594
    %597 = vrot.lane.b32.xlu0 %v592, 32
    %v598 = vpop.permute.xlu0 %597
    %v600 = vsel %vm76, %v598, 0
    %602 = vmatprep.subr.bf16.mxu0 0
    %603 = vmatpush1.bf16.msra.mxu0 0
    %604 = vmatprep.subr.bf16.mxu0 0
    %605 = vmatpush1.bf16.msra.mxu0 0
    %606 = vmatprep.subr.bf16.mxu0 0
    %607 = vmatpush1.bf16.msra.mxu0 0
    %608 = vmatprep.subr.bf16.mxu0 0
    %609 = vmatpush1.bf16.msra.mxu0 0
    %610 = vmatprep.subr.bf16.mxu0 0
    %611 = vmatpush1.bf16.msra.mxu0 0
    %612 = vmatprep.subr.bf16.mxu0 0
    %613 = vmatpush1.bf16.msra.mxu0 0
    %614 = vmatprep.subr.bf16.mxu0 0
    %615 = vmatpush1.bf16.msra.mxu0 %v73
    %616 = vmatprep.subr.bf16.mxu0 0
    %617 = vmatpush1.bf16.msra.mxu0 %v72
    %618 = vmatprep.subr.bf16.mxu0 0
    %619 = vmatpush2.bf16.msra.mxu0 0
    %620 = vmatprep.subr.bf16.mxu0 0
    %621 = vmatpush2.bf16.msra.mxu0 0
    %622 = vmatprep.subr.bf16.mxu0 0
    %623 = vmatpush2.bf16.msra.mxu0 0
    %624 = vmatprep.subr.bf16.mxu0 0
    %625 = vmatpush2.bf16.msra.mxu0 0
    %626 = vmatprep.subr.bf16.mxu0 0
    %627 = vmatpush2.bf16.msra.mxu0 0
    %628 = vmatprep.subr.bf16.mxu0 0
    %629 = vmatpush2.bf16.msra.mxu0 0
    %630 = vmatprep.subr.bf16.mxu0 0
    %631 = vmatpush2.bf16.msra.mxu0 0
    %632 = vmatprep.subr.bf16.mxu0 0
    %633 = vmatpush2.bf16.msra.mxu0 0
    %634 = vmatprep.mubr.bf16.mxu0 0
    %635 = vmatmul.mubr.bf16.gmra.mxu0 %v600
    %v636 = vpop.f32.mrf.mxu0
    %v637 = vadd.f32 %v595, %v636
    %v638 = vpop.f32.mrf.mxu0
    %v639 = vpop.f32.mrf.mxu0
    %v640 = vpop.f32.mrf.mxu0
    %641 = vdwg.mxu0
    %v642 = vxor.u32 %v637, 2147483648
    %v643 = vmul.f32 %v642, 1.442695
    %v644 = vpow.pop %v643
    %v645 = vadd.f32 %v644, 1.0
    %v646 = vrcp.pop %v645
    %v647 = vmul.f32 1.0, %v646
    %v648 = vtanh.pop %v637
    %v649 = vmul.f32 %v647, %v585
    %651 = vrot.lane.b32.xlu0 %v648, 64
    %v652 = vpop.permute.xlu0 %651
    %v654 = vmul.f32 %v647, %v652
    %656 = vrot.lane.b32.xlu0 %v654, 32
    %v657 = vpop.permute.xlu0 %656
    %v659 = vadd.f32 %v649, %v657
    %v660 = vtanh.pop %v659
    %662 = vrot.lane.b32.xlu0 %v660, 64
    %v663 = vpop.permute.xlu0 %662
    %v665 = vmul.f32 %v647, %v663
    %667 = vrot.lane.b32.xlu0 %v665, 32
    %v668 = vpop.permute.xlu0 %667
    %670 = vst.msk [vmem:[#allocation2] sm:$0xff] %vm76, %v668
    %672 = vrot.lane.b32.xlu0 %v659, 96
    %v673 = vpop.permute.xlu0 %672
    %675 = vst.msk [vmem:[#allocation3] sm:$0xff] %vm76, %v673
    // Predicated region
    $region26: #{tpu_custom_call.1} parent=1 // pred_check
      %p676 = pneg %p48
    $region27: #{tpu_custom_call.1} parent=1 // pred_check_branch
      %678 = sbr.rel (%p676) target = $region29
    $region28: #{tpu_custom_call.1} parent=1 // pred_region
      %679 = vst.msk [vmem:[#allocation9] sm:$0xff] %vm76, %v668
      %680 = vst.msk [vmem:[#allocation10] sm:$0xff] %vm76, %v673
      %v681 = vld [vmem:[%s2] sm:$0x1]
      %v683 = vlaneseq
      %v684 = vshrl.u32 %v683, 7
      %v685 = vsub.s32 0, %v684
      %v686 = vrot.slane %v681, %v685
      %687 = vrot.lane.b32.xlu0 %v686, 96
      %v688 = vpop.permute.xlu0 %687
      %v690 = vmul.f32 %v665, %v688
      %692 = vrot.lane.b32.xlu0 %v690, 32
      %v693 = vpop.permute.xlu0 %692
      %v695 = vsel %vm76, %v693, 0.0
      %696 = vadd.xlane.f32.xlu0 %v695
      %v697 = vpop.xlane.xlu0 %696
      %vm698 = vcmask 7168
      %699 = vst.msk [vmem:[%s3] sm:$0xff] %vm698, %v697
    $region29: #{tpu_custom_call.1} parent=1 // pred_fallthru
      _
    // Predicated region
    $region30: #{tpu_custom_call.1} parent=1 // pred_check
      _
    $region31: #{tpu_custom_call.1} parent=1 // pred_check_branch
      %701 = sbr.rel (0) target = $region33
    $region32: #{tpu_custom_call.1} parent=1 // pred_region
      _
    $region33: #{tpu_custom_call.1} parent=1 // pred_fallthru
      _
    // Predicated region
    $region34: #{tpu_custom_call.1} parent=1 // pred_check
      _
    $region35: #{tpu_custom_call.1} parent=1 // pred_check_branch
      %703 = sbr.rel (0) target = $region37
    $region36: #{tpu_custom_call.1} parent=1 // pred_region
      %s705 = ssub.s32 128, 128
      %706 = vsyncadd [#allocation6], %s705
      %s708 = sshll.u32 [#allocation9], 4
      %s709 = int_to_ptr.vmem [resolvable:$true] %s708
      %711 = dma.vmem_to_hbm [thread:$0]  %s709, 128, %s4, [#allocation6]
    $region37: #{tpu_custom_call.1} parent=1 // pred_fallthru
      _
    // Predicated region
    $region38: #{tpu_custom_call.1} parent=1 // pred_check
      _
    $region39: #{tpu_custom_call.1} parent=1 // pred_check_branch
      %713 = sbr.rel (0) target = $region41
    $region40: #{tpu_custom_call.1} parent=1 // pred_region
      %s715 = ssub.s32 128, 128
      %716 = vsyncadd [#allocation11], %s715
      %s718 = sshll.u32 [#allocation10], 4
      %s719 = int_to_ptr.vmem [resolvable:$true] %s718
      %721 = dma.vmem_to_hbm [thread:$0]  %s719, 128, %s5, [#allocation11]
    $region41: #{tpu_custom_call.1} parent=1 // pred_fallthru
      _
    // Predicated region
    $region42: #{tpu_custom_call.1} parent=1 // pred_check
      _
    $region43: #{tpu_custom_call.1} parent=1 // pred_check_branch
      %723 = sbr.rel (0) target = $region45
    $region44: #{tpu_custom_call.1} parent=1 // pred_region
      _
    $region45: #{tpu_custom_call.1} parent=1 // pred_fallthru
      _
    // Predicated region
    $region46: #{tpu_custom_call.1} parent=1 // pred_check
      _
    $region47: #{tpu_custom_call.1} parent=1 // pred_check_branch
      %725 = sbr.rel (0) target = $region49
    $region48: #{tpu_custom_call.1} parent=1 // pred_region
      %726 = dma.done [#allocation6], 128
    $region49: #{tpu_custom_call.1} parent=1 // pred_fallthru
      _
    // Predicated region
    $region50: #{tpu_custom_call.1} parent=1 // pred_check
      _
    $region51: #{tpu_custom_call.1} parent=1 // pred_check_branch
      %728 = sbr.rel (0) target = $region53
    $region52: #{tpu_custom_call.1} parent=1 // pred_region
      %729 = dma.done [#allocation11], 128
    $region53: #{tpu_custom_call.1} parent=1 // pred_fallthru
      _
    %730 = vsyncpa [#allocation5], 1
    %731 = vsyncpa [#allocation8], 1
    %732 = vsyncpa [#allocation6], 1
    %733 = vsyncpa [#allocation11], 1

</llo_original>
